<compile_context>
chip_gen: v7x
topology: tpu7x:2x2x1
jax: 0.10.0
libtpu: 0.0.40
codegen_flags: <defaults>
</compile_context>

<pallas_src>
import functools

import jax
import jax.numpy as jnp
from jax import lax
from jax.experimental import pallas as pl
from jax.experimental.pallas import tpu as pltpu

NUM_CLASSES = 20
ADF_EPS = 1e-5     # eps inside adf.Softmax.forward
LOSS_EPS = 1e-5    # eps in SoftmaxHeteroscedasticLoss.forward
KEEP_VAR = 0.001   # keep_variance_fn(x) = x + 0.001

# Explicit scoped-VMEM request: safe on every generation (< 64 MiB physical
# on v7x, << 128 MiB on v5e/v6e) and above the 16/32 MiB defaults.
_VMEM_LIMIT_BYTES = 56 * 1024 * 1024
# Per-lane VMEM bytes at f32: 2 inputs x 2 buffers x 24 padded sublanes x 4 B
# (=384) + int32 targets 2 x 8 x 4 (=64) + ~8 full-tile f32 temporaries
# materialized by Mosaic for the elementwise chain (~768).
_BYTES_PER_LANE = 384 + 64 + 768


def _loss_kernel(fm_ref, fv_ref, tgt_ref, out_ref, *, hw, tile_hw, needs_mask):
    """One (image i, hw-tile j) step.

    Refs: fm/fv (C, tile_hw), tgt (1, tile_hw), out (1, 1) — the per-tile
    partial sum of (precision*(t-mean)^2 + log(var+eps)) over this tile.
    """
    j = pl.program_id(1)

    fm = fm_ref[...].astype(jnp.float32)      # (C, tile_hw); bf16 inputs upcast here
    fv = fv_ref[...].astype(jnp.float32)

    if needs_mask:
        # Mask the INPUTS of padded lanes (last, ragged tile) so the math below
        # stays finite everywhere; the loss elements are masked again before
        # the reduction so padded lanes contribute exactly zero.
        lanes = lax.broadcasted_iota(jnp.int32, (1, tile_hw), 1) + j * tile_hw
        valid = lanes < hw                    # (1, tile_hw), broadcasts over classes
        fm = jnp.where(valid, fm, 0.0)
        fv = jnp.where(valid, fv, 0.0)

    # --- adf.Softmax over the class (sublane) axis: log-normal moment matching ---
    em = jnp.exp(fm + 0.5 * fv)                               # EUP exp #1
    const = jnp.sum(em, axis=0, keepdims=True) + ADF_EPS      # (1, tile_hw) per pixel
    inv_const = pl.reciprocal(const, approx=True)
    inv_const = inv_const * (2.0 - const * inv_const)         # 1 Newton step (per pixel)
    out_mean = em * inv_const
    # out_var = exp(2*lg_mean)*(exp(fv)-1)/const^2 + keep == out_mean^2*(exp(fv)-1) + keep
    out_var = (out_mean * out_mean) * (jnp.exp(fv) - 1.0) + KEEP_VAR   # EUP exp #2

    # --- one-hot targets along the class (sublane) axis ---
    cls_ids = lax.broadcasted_iota(jnp.int32, fm.shape, 0)
    onehot = (cls_ids == tgt_ref[...]).astype(jnp.float32)

    # --- heteroscedastic NLL elements (both 0.5 factors hoisted to the wrapper) ---
    var_eps = out_var + LOSS_EPS
    precision = pl.reciprocal(var_eps, approx=True)
    precision = precision * (2.0 - var_eps * precision)       # 1 Newton step
    diff = onehot - out_mean
    elems = precision * (diff * diff) + jnp.log(var_eps)      # EUP log

    if needs_mask:
        elems = jnp.where(valid, elems, 0.0)

    # Per-tile scalar partial: sublane (class) reduction, then one cross-lane
    # reduction; both hidden under the tile's HBM DMA.
    out_ref[...] = jnp.sum(jnp.sum(elems, axis=0, keepdims=True),
                           axis=1, keepdims=True)             # (1, 1)


def softmax_heteroscedastic_loss(features_mean, features_var, targets, *,
                                 max_tile_hw=32768):
    """features_mean / features_var: (N, 20, H, W); targets: (N, H, W) int."""
    n, c, h, w = features_mean.shape
    assert c == NUM_CLASSES
    hw = h * w

    # Natural-layout glue: contiguous (free) reshapes only, no transpose pass.
    fm = features_mean.reshape(n, c, hw)
    fv = features_var.reshape(n, c, hw)
    tg = targets.reshape(n, 1, hw).astype(jnp.int32)

    # Lane-tile size: largest multiple of 128 that fits the VMEM budget
    # (double-buffered padded inputs + Mosaic elementwise temporaries), capped
    # at the requested maximum.  Ragged tails are masked in-kernel.
    budget_lanes = int(0.75 * _VMEM_LIMIT_BYTES) // _BYTES_PER_LANE
    budget_lanes = max(128, (budget_lanes // 128) * 128)
    max_tile_hw = max(128, (max_tile_hw // 128) * 128)
    max_tile_hw = min(max_tile_hw, budget_lanes)
    tile_hw = hw if hw <= max_tile_hw else max_tile_hw
    num_t = (hw + tile_hw - 1) // tile_hw
    needs_mask = (hw % tile_hw) != 0

    kernel = functools.partial(_loss_kernel, hw=hw, tile_hw=tile_hw,
                               needs_mask=needs_mask)

    partials = pl.pallas_call(
        kernel,
        # One scalar partial per (image, hw-tile); summed below.
        out_shape=jax.ShapeDtypeStruct((n * num_t, 1, 1), jnp.float32),
        grid_spec=pltpu.PrefetchScalarGridSpec(
            num_scalar_prefetch=0,
            grid=(n, num_t),
            in_specs=[
                pl.BlockSpec((None, c, tile_hw), lambda i, j: (i, 0, j)),
                pl.BlockSpec((None, c, tile_hw), lambda i, j: (i, 0, j)),
                pl.BlockSpec((None, 1, tile_hw), lambda i, j: (i, 0, j)),
            ],
            out_specs=pl.BlockSpec((None, 1, 1),
                                   lambda i, j: (i * num_t + j, 0, 0)),
        ),
        compiler_params=pltpu.CompilerParams(
            # Both axes fully independent now (no resident accumulator), so
            # both can be sharded across v7x's two TensorCores; harmless on
            # single-core v5e/v6e.
            dimension_semantics=("parallel", "parallel"),
            vmem_limit_bytes=_VMEM_LIMIT_BYTES),
    )(fm, fv, tg)

    # Both 0.5 factors were hoisted out of the kernel -> divide by 2*N*C*H*W.
    return jnp.sum(partials) / jnp.float32(2 * n * c * h * w)


def _reference_loss(features_mean, features_var, targets):
    """Pure-JAX mirror of the PyTorch forward, for a sanity check."""
    fm = features_mean.astype(jnp.float32)
    fv = features_var.astype(jnp.float32)
    lg_mean = fm + 0.5 * fv
    lg_var = jnp.exp(2.0 * lg_mean) * (jnp.exp(fv) - 1.0)
    lg_mean = jnp.exp(lg_mean)
    const = jnp.sum(lg_mean, axis=1, keepdims=True) + ADF_EPS
    mean = lg_mean / const
    var = lg_var / (const * const) + KEEP_VAR
    onehot = jax.nn.one_hot(targets, NUM_CLASSES, dtype=jnp.float32)  # (N,H,W,C)
    onehot = jnp.transpose(onehot, (0, 3, 1, 2))                      # -> NCHW
    precision = 1.0 / (var + LOSS_EPS)
    return jnp.mean(0.5 * precision * (onehot - mean) ** 2
                    + 0.5 * jnp.log(var + LOSS_EPS))


if __name__ == "__main__":
    key = jax.random.PRNGKey(0)
    k1, k2, k3, k4, k5, k6 = jax.random.split(key, 6)

    # Tolerance 2e-3 (vs exact-division reference); with the Newton-refined
    # reciprocals the observed deviation is far smaller.
    RTOL, ATOL = 2e-3, 1e-3

    # Primary case: N=2, C=20, H=W=16 (single hw tile per image).
    N, C, H, W = 2, NUM_CLASSES, 16, 16
    features_mean = jax.random.normal(k1, (N, C, H, W), dtype=jnp.float32)
    features_var = jax.random.uniform(k2, (N, C, H, W), dtype=jnp.float32,
                                      minval=0.05, maxval=0.5)
    targets = jax.random.randint(k3, (N, H, W), 0, NUM_CLASSES, dtype=jnp.int32)

    loss = jax.block_until_ready(
        softmax_heteroscedastic_loss(features_mean, features_var, targets))
    ref = jax.block_until_ready(
        _reference_loss(features_mean, features_var, targets))
    assert jnp.allclose(loss, ref, rtol=RTOL, atol=ATOL), (loss, ref)

    # Secondary case exercising multi-tile + ragged-tail masking:
    # H*W = 320 with tile_hw forced to 128 -> 3 tiles per image, last masked.
    H2, W2 = 16, 20
    fm2 = jax.random.normal(k4, (N, C, H2, W2), dtype=jnp.float32)
    fv2 = jax.random.uniform(k5, (N, C, H2, W2), dtype=jnp.float32,
                             minval=0.05, maxval=0.5)
    tg2 = jax.random.randint(k6, (N, H2, W2), 0, NUM_CLASSES, dtype=jnp.int32)
    loss2 = jax.block_until_ready(
        softmax_heteroscedastic_loss(fm2, fv2, tg2, max_tile_hw=128))
    ref2 = jax.block_until_ready(_reference_loss(fm2, fv2, tg2))
    assert jnp.allclose(loss2, ref2, rtol=RTOL, atol=ATOL), (loss2, ref2)

    print("KERNEL_OK")
</pallas_src>

<mosaic_0001>
module attributes {stable_mosaic.version = 11 : i64} {
  func.func @_loss_kernel(%arg0: i32, %arg1: i32, %arg2: memref<1x20x256xf32, #tpu.memory_space<vmem>>, %arg3: memref<1x20x256xf32, #tpu.memory_space<vmem>>, %arg4: memref<1x1x256xi32, #tpu.memory_space<vmem>>, %arg5: memref<1x1x1xf32, #tpu.memory_space<vmem>>) attributes {dimension_semantics = [#tpu.dimension_semantics<parallel>, #tpu.dimension_semantics<parallel>], iteration_bounds = array<i64: 2, 1>, scalar_prefetch = 0 : i64, scratch_operands = 0 : i64, tpu.core_type = #tpu.core_type<tc>, window_params = [{transform_indices = @transform_0, window_bounds = array<i64: 1, 20, 256>}, {transform_indices = @transform_1, window_bounds = array<i64: 1, 20, 256>}, {transform_indices = @transform_2, window_bounds = array<i64: 1, 1, 256>}, {transform_indices = @transform_3, window_bounds = array<i64: 1, 1, 1>}]} {
    %c0 = arith.constant 0 : index
    %c0_0 = arith.constant 0 : index
    %c0_1 = arith.constant 0 : index
    %0 = vector.load %arg2[%c0, %c0_0, %c0_1] : memref<1x20x256xf32, #tpu.memory_space<vmem>>, vector<1x20x256xf32>
    %1 = vector.shape_cast %0 : vector<1x20x256xf32> to vector<20x256xf32>
    %c0_2 = arith.constant 0 : index
    %c0_3 = arith.constant 0 : index
    %c0_4 = arith.constant 0 : index
    %2 = vector.load %arg3[%c0_2, %c0_3, %c0_4] : memref<1x20x256xf32, #tpu.memory_space<vmem>>, vector<1x20x256xf32>
    %3 = vector.shape_cast %2 : vector<1x20x256xf32> to vector<20x256xf32>
    %cst = arith.constant 5.000000e-01 : f32
    %4 = vector.broadcast %cst : f32 to vector<20x256xf32>
    %5 = arith.mulf %4, %3 : vector<20x256xf32>
    %6 = arith.addf %1, %5 : vector<20x256xf32>
    %7 = math.exp %6 : vector<20x256xf32>
    %cst_5 = arith.constant dense<0.000000e+00> : vector<256xf32>
    %8 = vector.multi_reduction <add>, %7, %cst_5 [0] : vector<20x256xf32> to vector<256xf32>
    %9 = vector.shape_cast %8 : vector<256xf32> to vector<1x256xf32>
    %cst_6 = arith.constant 9.99999974E-6 : f32
    %10 = vector.broadcast %cst_6 : f32 to vector<1x256xf32>
    %11 = arith.addf %9, %10 : vector<1x256xf32>
    %12 = tpu.reciprocal %11 {approx = true} : vector<1x256xf32> -> vector<1x256xf32>
    %13 = arith.mulf %11, %12 : vector<1x256xf32>
    %cst_7 = arith.constant 2.000000e+00 : f32
    %14 = vector.broadcast %cst_7 : f32 to vector<1x256xf32>
    %15 = arith.subf %14, %13 : vector<1x256xf32>
    %16 = arith.mulf %12, %15 : vector<1x256xf32>
    %17 = vector.broadcast %16 : vector<1x256xf32> to vector<20x256xf32>
    %18 = arith.mulf %7, %17 : vector<20x256xf32>
    %19 = arith.mulf %18, %18 : vector<20x256xf32>
    %20 = math.exp %3 : vector<20x256xf32>
    %cst_8 = arith.constant 1.000000e+00 : f32
    %21 = vector.broadcast %cst_8 : f32 to vector<20x256xf32>
    %22 = arith.subf %20, %21 : vector<20x256xf32>
    %23 = arith.mulf %19, %22 : vector<20x256xf32>
    %cst_9 = arith.constant 1.000000e-03 : f32
    %24 = vector.broadcast %cst_9 : f32 to vector<20x256xf32>
    %25 = arith.addf %23, %24 : vector<20x256xf32>
    %26 = tpu.iota {dimensions = array<i32: 0>} : vector<20x256xi32>
    %c0_10 = arith.constant 0 : index
    %c0_11 = arith.constant 0 : index
    %c0_12 = arith.constant 0 : index
    %27 = vector.load %arg4[%c0_10, %c0_11, %c0_12] : memref<1x1x256xi32, #tpu.memory_space<vmem>>, vector<1x1x256xi32>
    %28 = vector.shape_cast %27 : vector<1x1x256xi32> to vector<1x256xi32>
    %29 = vector.broadcast %28 : vector<1x256xi32> to vector<20x256xi32>
    %30 = arith.cmpi eq, %26, %29 : vector<20x256xi32>
    %31 = arith.extui %30 : vector<20x256xi1> to vector<20x256xi32>
    %32 = arith.sitofp %31 : vector<20x256xi32> to vector<20x256xf32>
    %cst_13 = arith.constant 9.99999974E-6 : f32
    %33 = vector.broadcast %cst_13 : f32 to vector<20x256xf32>
    %34 = arith.addf %25, %33 : vector<20x256xf32>
    %35 = tpu.reciprocal %34 {approx = true} : vector<20x256xf32> -> vector<20x256xf32>
    %36 = arith.mulf %34, %35 : vector<20x256xf32>
    %cst_14 = arith.constant 2.000000e+00 : f32
    %37 = vector.broadcast %cst_14 : f32 to vector<20x256xf32>
    %38 = arith.subf %37, %36 : vector<20x256xf32>
    %39 = arith.mulf %35, %38 : vector<20x256xf32>
    %40 = arith.subf %32, %18 : vector<20x256xf32>
    %41 = arith.mulf %40, %40 : vector<20x256xf32>
    %42 = arith.mulf %39, %41 : vector<20x256xf32>
    %43 = math.log %34 : vector<20x256xf32>
    %44 = arith.addf %42, %43 : vector<20x256xf32>
    %cst_15 = arith.constant dense<0.000000e+00> : vector<256xf32>
    %45 = vector.multi_reduction <add>, %44, %cst_15 [0] : vector<20x256xf32> to vector<256xf32>
    %46 = vector.shape_cast %45 : vector<256xf32> to vector<1x256xf32>
    %cst_16 = arith.constant dense<0.000000e+00> : vector<1xf32>
    %47 = vector.multi_reduction <add>, %46, %cst_16 [1] : vector<1x256xf32> to vector<1xf32>
    %48 = vector.shape_cast %47 : vector<1xf32> to vector<1x1xf32>
    %c0_17 = arith.constant 0 : index
    %c0_18 = arith.constant 0 : index
    %c0_19 = arith.constant 0 : index
    %49 = vector.load %arg5[%c0_17, %c0_18, %c0_19] : memref<1x1x1xf32, #tpu.memory_space<vmem>>, vector<1x1x1xf32>
    %50 = vector.shape_cast %49 : vector<1x1x1xf32> to vector<1x1xf32>
    %51 = vector.shape_cast %48 : vector<1x1xf32> to vector<1x1x1xf32>
    tpu.vector_store %arg5[%c0_17, %c0_18, %c0_19], %51 {strides = array<i32>} : memref<1x1x1xf32, #tpu.memory_space<vmem>>, vector<1x1x1xf32>,
    return
  }
  func.func @transform_0(%arg0: i32, %arg1: i32) -> (i32, i32, i32) {
    %c0_i32 = arith.constant 0 : i32
    %c0_i32_0 = arith.constant 0 : i32
    return %arg0, %c0_i32, %arg1 : i32, i32, i32
  }
  func.func @transform_1(%arg0: i32, %arg1: i32) -> (i32, i32, i32) {
    %c0_i32 = arith.constant 0 : i32
    %c0_i32_0 = arith.constant 0 : i32
    return %arg0, %c0_i32, %arg1 : i32, i32, i32
  }
  func.func @transform_2(%arg0: i32, %arg1: i32) -> (i32, i32, i32) {
    %c0_i32 = arith.constant 0 : i32
    %c0_i32_0 = arith.constant 0 : i32
    return %arg0, %c0_i32, %arg1 : i32, i32, i32
  }
  func.func @transform_3(%arg0: i32, %arg1: i32) -> (i32, i32, i32) {
    %c1_i32 = arith.constant 1 : i32
    %0 = arith.muli %arg0, %c1_i32 : i32
    %1 = arith.addi %0, %arg1 : i32
    %c0_i32 = arith.constant 0 : i32
    %c0_i32_0 = arith.constant 0 : i32
    %c0_i32_1 = arith.constant 0 : i32
    return %1, %c0_i32, %c0_i32_0 : i32, i32, i32
  }
}

</mosaic_0001>

<llo_original>
// kernel: tpu_custom_call.1
$region0: #{tpu_custom_call.1}
  #allocation0 [shape = 'u32[]', space=smem, size = 0x4, offset = 0x4, fixed_abs, tag = 'smem constant byte address 0x4 - core index']
  #allocation1 [shape = 'u32[144,128]{1,0:T(1,128)}', space=vmem, size = 0x12000, scoped, tag = 'internal scratch']
  %s0 = inlined_call_operand.vmem [shape: f32[2,20,256], index: 0, kind: input, shape index: {}]
  %s1 = inlined_call_operand.vmem [shape: f32[2,20,256], index: 1, kind: input, shape index: {}]
  %s2 = inlined_call_operand.vmem [shape: s32[2,1,256], index: 2, kind: input, shape index: {}]
  %s3 = inlined_call_operand.vmem [shape: f32[2,1,1], index: 3, kind: output, shape index: {}]
  %s4 = sld [smem:[#allocation0]]
  $region45: #{tpu_custom_call.1} parent=0
    _
  %s6 = ssub.s32 1, %s4
  %s7 = scalar_select 0, %s6, %s4
  loop: start=0, step=1, limit=4
  $region2: #{tpu_custom_call.1} parent=0 // loop_pre_header
    _
  $region3: #{tpu_custom_call.1} parent=0 // loop_header
    %s9 = sphi 0, %s13
    %p10 = scmp.ge.s32.totalorder %s9, 4
    %s16 = sphi 0, %s28
    %s17 = sphi 0, %s24
    %s18 = sphi 0, %s16
    %s19 = sphi 0, %s17
    %s20 = sphi 0, %s18
    %s21 = sphi 0, %s19
    %s33 = sphi 0, %s35
    %s36 = sphi 0, %s33
    %s37 = sphi 0, %s36
    %s53 = sphi 0, %s37
    %s61 = sphi 0, %s63
    %s64 = sphi 0, %s61
    %s65 = sphi 0, %s64
    %s81 = sphi 0, %s65
    %s89 = sphi 0, %s91
    %s92 = sphi 0, %s89
    %s93 = sphi 0, %s92
    %s109 = sphi 0, %s93
    %s117 = sphi 0, %s119
    %s120 = sphi 0, %s117
    %s121 = sphi 0, %s120
    %s137 = sphi 0, %s121
  $region4: #{tpu_custom_call.1} parent=0 // loop_header_branch
    %12 = sbr.rel (%p10) target = $region8
  $region5: #{tpu_custom_call.1} parent=0 // loop_body
    %s14 = ssub.s32 %s9, 1
    %s15 = ssub.s32 %s9, 2
    %s22 = sadd.s32 1, %s17
    %p23 = scmp.ge.s32.totalorder %s22, 1
    %s24 = scalar_select %p23, 0, %s22
    %s25 = sadd.s32 1, %s16
    %s26 = scalar_select %p23, %s25, %s16
    %p27 = scmp.ge.s32.totalorder %s26, 2
    %s28 = scalar_select %p27, 0, %s26
    %s29 = ssub.s32 %s16, %s28
    %s30 = ssub.s32 %s17, %s24
    %s31 = sor.u32 %s29, %s30
    %p32 = scmp.eq.s32.totalorder %s31, 0
    %s34 = sadd.s32 %s33, 1
    %s35 = scalar_select %p32, %s33, %s34
    %p38 = pneg %p32
    %p39 = scmp.eq.s32.totalorder %s9, 1
    %p40 = por %p38, %p39
    %p41 = scmp.ne.s32.totalorder %s33, %s36
    %p42 = scmp.eq.s32.totalorder %s9, 0
    %p43 = por %p41, %p42
    %p44 = scmp.ne.s32.totalorder %s33, %s36
    %p45 = scmp.eq.s32.totalorder %s14, 1
    %p46 = por %p44, %p45
    %p47 = scmp.ne.s32.totalorder %s36, %s37
    %p48 = scmp.eq.s32.totalorder %s14, 0
    %p49 = por %p47, %p48
    %p50 = scmp.ne.s32.totalorder %s36, %s37
    %p51 = scmp.eq.s32.totalorder %s15, 1
    %p52 = por %p50, %p51
    %p54 = scmp.ne.s32.totalorder %s37, %s53
    %p55 = scmp.eq.s32.totalorder %s15, 0
    %p56 = por %p54, %p55
    %s57 = ssub.s32 %s16, %s28
    %s58 = ssub.s32 %s17, %s24
    %s59 = sor.u32 %s57, %s58
    %p60 = scmp.eq.s32.totalorder %s59, 0
    %s62 = sadd.s32 %s61, 1
    %s63 = scalar_select %p60, %s61, %s62
    %p66 = pneg %p60
    %p67 = scmp.eq.s32.totalorder %s9, 1
    %p68 = por %p66, %p67
    %p69 = scmp.ne.s32.totalorder %s61, %s64
    %p70 = scmp.eq.s32.totalorder %s9, 0
    %p71 = por %p69, %p70
    %p72 = scmp.ne.s32.totalorder %s61, %s64
    %p73 = scmp.eq.s32.totalorder %s14, 1
    %p74 = por %p72, %p73
    %p75 = scmp.ne.s32.totalorder %s64, %s65
    %p76 = scmp.eq.s32.totalorder %s14, 0
    %p77 = por %p75, %p76
    %p78 = scmp.ne.s32.totalorder %s64, %s65
    %p79 = scmp.eq.s32.totalorder %s15, 1
    %p80 = por %p78, %p79
    %p82 = scmp.ne.s32.totalorder %s65, %s81
    %p83 = scmp.eq.s32.totalorder %s15, 0
    %p84 = por %p82, %p83
    %s85 = ssub.s32 %s16, %s28
    %s86 = ssub.s32 %s17, %s24
    %s87 = sor.u32 %s85, %s86
    %p88 = scmp.eq.s32.totalorder %s87, 0
    %s90 = sadd.s32 %s89, 1
    %s91 = scalar_select %p88, %s89, %s90
    %p94 = pneg %p88
    %p95 = scmp.eq.s32.totalorder %s9, 1
    %p96 = por %p94, %p95
    %p97 = scmp.ne.s32.totalorder %s89, %s92
    %p98 = scmp.eq.s32.totalorder %s9, 0
    %p99 = por %p97, %p98
    %p100 = scmp.ne.s32.totalorder %s89, %s92
    %p101 = scmp.eq.s32.totalorder %s14, 1
    %p102 = por %p100, %p101
    %p103 = scmp.ne.s32.totalorder %s92, %s93
    %p104 = scmp.eq.s32.totalorder %s14, 0
    %p105 = por %p103, %p104
    %p106 = scmp.ne.s32.totalorder %s92, %s93
    %p107 = scmp.eq.s32.totalorder %s15, 1
    %p108 = por %p106, %p107
    %p110 = scmp.ne.s32.totalorder %s93, %s109
    %p111 = scmp.eq.s32.totalorder %s15, 0
    %p112 = por %p110, %p111
    %s113 = sadd.s32 %s16, %s17
    %s114 = sadd.s32 %s28, %s24
    %s115 = ssub.s32 %s113, %s114
    %p116 = scmp.eq.s32.totalorder %s115, 0
    %s118 = sadd.s32 %s117, 1
    %s119 = scalar_select %p116, %s117, %s118
    %p122 = pneg %p116
    %p123 = scmp.eq.s32.totalorder %s9, 1
    %p124 = por %p122, %p123
    %p125 = scmp.ne.s32.totalorder %s117, %s120
    %p126 = scmp.eq.s32.totalorder %s9, 0
    %p127 = por %p125, %p126
    %p128 = scmp.ne.s32.totalorder %s117, %s120
    %p129 = scmp.eq.s32.totalorder %s14, 1
    %p130 = por %p128, %p129
    %p131 = scmp.ne.s32.totalorder %s120, %s121
    %p132 = scmp.eq.s32.totalorder %s14, 0
    %p133 = por %p131, %p132
    %p134 = scmp.ne.s32.totalorder %s120, %s121
    %p135 = scmp.eq.s32.totalorder %s15, 1
    %p136 = por %p134, %p135
    %p138 = scmp.ne.s32.totalorder %s121, %s137
    %p139 = scmp.eq.s32.totalorder %s15, 0
    %p140 = por %p138, %p139
    %p141 = scmp.le.s32.totalorder 1, %s9
    %p142 = scmp.lt.s32.totalorder %s9, 3
    %p143 = pnand %p141, %p142
    %p144 = pneg %p143
    // Predicated region
    $region9: #{tpu_custom_call.1} parent=5 // pred_check
      _
    $region10: #{tpu_custom_call.1} parent=5 // pred_check_branch
      %146 = sbr.rel (%p143) target = $region12
    $region11: #{tpu_custom_call.1} parent=5 // pred_region
      %s147 = ssub.s32 %s9, 1
    $region12: #{tpu_custom_call.1} parent=5 // pred_fallthru
      _
    %p148 = scmp.lt.s32.totalorder %s9, 2
    // Predicated region
    $region13: #{tpu_custom_call.1} parent=5 // pred_check
      %p149 = pneg %p148
    $region14: #{tpu_custom_call.1} parent=5 // pred_check_branch
      %151 = sbr.rel (%p149) target = $region16
    $region15: #{tpu_custom_call.1} parent=5 // pred_region
      // Predicated region
      $region17: #{tpu_custom_call.1} parent=15 // pred_check
        %p152 = pneg %p43
      $region18: #{tpu_custom_call.1} parent=15 // pred_check_branch
        %154 = sbr.rel (%p152) target = $region20
      $region19: #{tpu_custom_call.1} parent=15 // pred_region
        %s155 = smul.u32 2, %s17
        %p156 = scmp.lt.s32.totalorder %s16, 1
        %s157 = scalar_select %p156, %s16, 1
        %p158 = scmp.lt.s32.totalorder %s155, 1
        %s159 = scalar_select %p158, %s155, 1
        %s160 = smul.addr %s157, 6
        %s161 = sadd.s32 %s159, %s160
        %s162 = smul.addr %s161, 8
        %s163 = scalar_lea.vmem %s0, %s162
        %s164 = smul.u32 2, %s17
      $region20: #{tpu_custom_call.1} parent=15 // pred_fallthru
        _
      // Predicated region
      $region21: #{tpu_custom_call.1} parent=15 // pred_check
        %p165 = pneg %p71
      $region22: #{tpu_custom_call.1} parent=15 // pred_check_branch
        %167 = sbr.rel (%p165) target = $region24
      $region23: #{tpu_custom_call.1} parent=15 // pred_region
        %s168 = smul.u32 2, %s17
        %p169 = scmp.lt.s32.totalorder %s16, 1
        %s170 = scalar_select %p169, %s16, 1
        %p171 = scmp.lt.s32.totalorder %s168, 1
        %s172 = scalar_select %p171, %s168, 1
        %s173 = smul.addr %s170, 6
        %s174 = sadd.s32 %s172, %s173
        %s175 = smul.addr %s174, 8
        %s176 = scalar_lea.vmem %s1, %s175
        %s177 = smul.u32 2, %s17
      $region24: #{tpu_custom_call.1} parent=15 // pred_fallthru
        _
      // Predicated region
      $region25: #{tpu_custom_call.1} parent=15 // pred_check
        %p178 = pneg %p99
      $region26: #{tpu_custom_call.1} parent=15 // pred_check_branch
        %180 = sbr.rel (%p178) target = $region28
      $region27: #{tpu_custom_call.1} parent=15 // pred_region
        %s181 = smul.u32 2, %s17
        %p182 = scmp.lt.s32.totalorder %s16, 1
        %s183 = scalar_select %p182, %s16, 1
        %p184 = scmp.lt.s32.totalorder %s181, 1
        %s185 = scalar_select %p184, %s181, 1
        %s186 = smul.addr %s183, 2
        %s187 = sadd.s32 %s185, %s186
        %s188 = scalar_lea.vmem %s2, %s187
        %s189 = smul.u32 2, %s17
      $region28: #{tpu_custom_call.1} parent=15 // pred_fallthru
        _
    $region16: #{tpu_custom_call.1} parent=5 // pred_fallthru
      _
    %p190 = scmp.le.s32.totalorder 1, %s9
    %p191 = scmp.lt.s32.totalorder %s9, 3
    %p192 = pnand %p190, %p191
    %p193 = pneg %p192
    // Predicated region
    $region29: #{tpu_custom_call.1} parent=5 // pred_check
      _
    $region30: #{tpu_custom_call.1} parent=5 // pred_check_branch
      %195 = sbr.rel (%p192) target = $region32
    $region31: #{tpu_custom_call.1} parent=5 // pred_region
      %s196 = ssub.s32 %s9, 1
      %s197 = smul.u32 2, %s19
      %p198 = scmp.lt.s32.totalorder %s18, 1
      %s199 = scalar_select %p198, %s18, 1
      %p200 = scmp.lt.s32.totalorder %s197, 1
      %s201 = scalar_select %p200, %s197, 1
      %s202 = smul.addr %s199, 6
      %s203 = sadd.s32 %s201, %s202
      %s204 = smul.addr %s203, 8
      %s205 = scalar_lea.vmem %s0, %s204
      %p206 = pneg %p49
      %p207 = pneg %p46
      %s208 = smul.u32 2, %s19
      %p209 = scmp.lt.s32.totalorder %s18, 1
      %s210 = scalar_select %p209, %s18, 1
      %p211 = scmp.lt.s32.totalorder %s208, 1
      %s212 = scalar_select %p211, %s208, 1
      %s213 = smul.addr %s210, 6
      %s214 = sadd.s32 %s212, %s213
      %s215 = smul.addr %s214, 8
      %s216 = scalar_lea.vmem %s1, %s215
      %p217 = pneg %p77
      %p218 = pneg %p74
      %s219 = smul.u32 2, %s19
      %p220 = scmp.lt.s32.totalorder %s18, 1
      %s221 = scalar_select %p220, %s18, 1
      %p222 = scmp.lt.s32.totalorder %s219, 1
      %s223 = scalar_select %p222, %s219, 1
      %s224 = smul.addr %s221, 2
      %s225 = sadd.s32 %s223, %s224
      %s226 = scalar_lea.vmem %s2, %s225
      %p227 = pneg %p105
      %p228 = pneg %p102
      %p229 = pneg %p133
      %p230 = pneg %p130
      %s231 = sadd.s32 %s18, %s19
      %p232 = scmp.lt.s32.totalorder %s231, 1
      %s233 = scalar_select %p232, %s231, 1
      %s234 = scalar_lea.vmem %s3, %s233
      %s235 = smul.u32 2, %s19
      %p236 = scmp.lt.s32.totalorder %s18, 1
      %s237 = scalar_select %p236, %s18, 1
      %p238 = scmp.lt.s32.totalorder %s235, 1
      %s239 = scalar_select %p238, %s235, 1
      %s240 = smul.addr %s237, 6
      %s241 = sadd.s32 %s239, %s240
      %s242 = smul.addr %s241, 8
      %s243 = scalar_lea.vmem %s0, %s242
      %s244 = smul.u32 2, %s19
      %s245 = smul.u32 2, %s19
      %p246 = scmp.lt.s32.totalorder %s18, 1
      %s247 = scalar_select %p246, %s18, 1
      %p248 = scmp.lt.s32.totalorder %s245, 1
      %s249 = scalar_select %p248, %s245, 1
      %s250 = smul.addr %s247, 6
      %s251 = sadd.s32 %s249, %s250
      %s252 = smul.addr %s251, 8
      %s253 = scalar_lea.vmem %s1, %s252
      %s254 = smul.u32 2, %s19
      %s255 = smul.u32 2, %s19
      %p256 = scmp.lt.s32.totalorder %s18, 1
      %s257 = scalar_select %p256, %s18, 1
      %p258 = scmp.lt.s32.totalorder %s255, 1
      %s259 = scalar_select %p258, %s255, 1
      %s260 = smul.addr %s257, 2
      %s261 = sadd.s32 %s259, %s260
      %s262 = scalar_lea.vmem %s2, %s261
      %s263 = smul.u32 2, %s19
      %s264 = sadd.s32 %s18, %s19
      %p265 = scmp.lt.s32.totalorder %s264, 1
      %s266 = scalar_select %p265, %s264, 1
      %s267 = scalar_lea.vmem %s3, %s266
      %s268 = sadd.s32 %s18, %s19
      %v269 = vld [vmem:[%s243] sm:$0xff]
      %v270 = vld [vmem:[%s243 + $0x8] sm:$0xff]
      %v271 = vld [vmem:[%s243 + $0x10] sm:$0xff]
      %v272 = vld [vmem:[%s243 + $0x18] sm:$0xff]
      %v273 = vld [vmem:[%s243 + $0x20] sm:$0xf]
      %v274 = vld [vmem:[%s243 + $0x28] sm:$0xf]
      %v275 = vld [vmem:[%s253] sm:$0xff]
      %v276 = vld [vmem:[%s253 + $0x8] sm:$0xff]
      %v277 = vld [vmem:[%s253 + $0x10] sm:$0xff]
      %v278 = vld [vmem:[%s253 + $0x18] sm:$0xff]
      %v279 = vld [vmem:[%s253 + $0x20] sm:$0xf]
      %v280 = vld [vmem:[%s253 + $0x28] sm:$0xf]
      %v281 = vmul.f32 %v275, 0.5
      %v282 = vmul.f32 %v276, 0.5
      %v283 = vmul.f32 %v277, 0.5
      %v284 = vmul.f32 %v278, 0.5
      %v285 = vmul.f32 %v279, 0.5
      %v286 = vmul.f32 %v280, 0.5
      %v287 = vadd.f32 %v269, %v281
      %v288 = vadd.f32 %v270, %v282
      %v289 = vadd.f32 %v271, %v283
      %v290 = vadd.f32 %v272, %v284
      %v291 = vadd.f32 %v273, %v285
      %v292 = vadd.f32 %v274, %v286
      %v293 = vmul.f32 %v287, 1.442695
      %v294 = vpow.pop %v293
      %v295 = vmul.f32 %v288, 1.442695
      %v296 = vpow.pop %v295
      %v297 = vmul.f32 %v289, 1.442695
      %v298 = vpow.pop %v297
      %v299 = vmul.f32 %v290, 1.442695
      %v300 = vpow.pop %v299
      %v301 = vmul.f32 %v291, 1.442695
      %v302 = vpow.pop %v301
      %v303 = vmul.f32 %v292, 1.442695
      %v304 = vpow.pop %v303
      %v305 = vadd.f32 %v294, %v298
      %vm306 = vcmask 1043456
      %v307 = vsel %vm306, %v302, 0.0
      %v308 = vadd.f32 %v305, %v307
      %v309 = vrot.slane %v308, 4
      %v310 = vadd.f32 %v308, %v309
      %v311 = vrot.slane %v310, 2
      %v312 = vadd.f32 %v310, %v311
      %v313 = vrot.slane %v312, 1
      %v314 = vadd.f32 %v312, %v313
      %v315 = vadd.f32 %v296, %v300
      %v316 = vsel %vm306, %v304, 0.0
      %v317 = vadd.f32 %v315, %v316
      %v318 = vrot.slane %v317, 4
      %v319 = vadd.f32 %v317, %v318
      %v320 = vrot.slane %v319, 2
      %v321 = vadd.f32 %v319, %v320
      %v322 = vrot.slane %v321, 1
      %v323 = vadd.f32 %v321, %v322
      %v324 = vadd.f32 %v314, 1e-05
      %v325 = vadd.f32 %v323, 1e-05
      %v326 = vrcp.pop %v324
      %v327 = vrcp.pop %v325
      %v328 = vmul.f32 %v324, %v326
      %v329 = vmul.f32 %v325, %v327
      %v330 = vsub.f32 2.0, %v328
      %v331 = vsub.f32 2.0, %v329
      %v332 = vmul.f32 %v326, %v330
      %v333 = vmul.f32 %v327, %v331
      %v334 = vmul.f32 %v294, %v332
      %v335 = vmul.f32 %v296, %v333
      %v336 = vmul.f32 %v298, %v332
      %v337 = vmul.f32 %v300, %v333
      %v338 = vmul.f32 %v302, %v332
      %v339 = vmul.f32 %v304, %v333
      %v340 = vmul.f32 %v334, %v334
      %v341 = vmul.f32 %v335, %v335
      %v342 = vmul.f32 %v336, %v336
      %v343 = vmul.f32 %v337, %v337
      %v344 = vmul.f32 %v338, %v338
      %v345 = vmul.f32 %v339, %v339
      %v346 = vmul.f32 %v275, 1.442695
      %v347 = vpow.pop %v346
      %v348 = vmul.f32 %v276, 1.442695
      %v349 = vpow.pop %v348
      %v350 = vmul.f32 %v277, 1.442695
      %v351 = vpow.pop %v350
      %v352 = vmul.f32 %v278, 1.442695
      %v353 = vpow.pop %v352
      %v354 = vmul.f32 %v279, 1.442695
      %v355 = vpow.pop %v354
      %v356 = vmul.f32 %v280, 1.442695
      %v357 = vpow.pop %v356
      %v358 = vsub.f32 %v347, 1.0
      %v359 = vsub.f32 %v349, 1.0
      %v360 = vsub.f32 %v351, 1.0
      %v361 = vsub.f32 %v353, 1.0
      %v362 = vsub.f32 %v355, 1.0
      %v363 = vsub.f32 %v357, 1.0
      %v364 = vmul.f32 %v340, %v358
      %v365 = vmul.f32 %v341, %v359
      %v366 = vmul.f32 %v342, %v360
      %v367 = vmul.f32 %v343, %v361
      %v368 = vmul.f32 %v344, %v362
      %v369 = vmul.f32 %v345, %v363
      %v370 = vadd.f32 %v364, 0.001
      %v371 = vadd.f32 %v365, 0.001
      %v372 = vadd.f32 %v366, 0.001
      %v373 = vadd.f32 %v367, 0.001
      %v374 = vadd.f32 %v368, 0.001
      %v375 = vadd.f32 %v369, 0.001
      %v376 = vlaneseq
      %v377 = vshrl.u32 %v376, 7
      %v378 = vadd.s32 %v377, 8
      %v379 = vadd.s32 %v377, 16
      %v380 = vld [vmem:[%s262] sm:$0x3]
      %v381 = vlaneseq
      %v382 = vshrl.u32 %v381, 7
      %v383 = vsub.s32 0, %v382
      %v384 = vrot.slane %v380, %v383
      %v385 = vlaneseq
      %v386 = vshrl.u32 %v385, 7
      %v387 = vsub.s32 1, %v386
      %v388 = vrot.slane %v380, %v387
      %vm389 = vcmp.eq.s32.totalorder %v377, %v384
      %vm390 = vcmp.eq.s32.totalorder %v377, %v388
      %vm391 = vcmp.eq.s32.totalorder %v378, %v384
      %vm392 = vcmp.eq.s32.totalorder %v378, %v388
      %vm393 = vcmp.eq.s32.totalorder %v379, %v384
      %vm394 = vcmp.eq.s32.totalorder %v379, %v388
      %v395 = vsel %vm389, 1, 0
      %v396 = vsel %vm390, 1, 0
      %v397 = vsel %vm391, 1, 0
      %v398 = vsel %vm392, 1, 0
      %v399 = vsel %vm393, 1, 0
      %v400 = vsel %vm394, 1, 0
      %v401 = vcvt.s32.f32 %v395
      %v402 = vcvt.s32.f32 %v396
      %v403 = vcvt.s32.f32 %v397
      %v404 = vcvt.s32.f32 %v398
      %v405 = vcvt.s32.f32 %v399
      %v406 = vcvt.s32.f32 %v400
      %v407 = vadd.f32 %v370, 1e-05
      %v408 = vadd.f32 %v371, 1e-05
      %v409 = vadd.f32 %v372, 1e-05
      %v410 = vadd.f32 %v373, 1e-05
      %v411 = vadd.f32 %v374, 1e-05
      %v412 = vadd.f32 %v375, 1e-05
      %v413 = vrcp.pop %v407
      %v414 = vrcp.pop %v408
      %v415 = vrcp.pop %v409
      %v416 = vrcp.pop %v410
      %v417 = vrcp.pop %v411
      %v418 = vrcp.pop %v412
      %v419 = vmul.f32 %v407, %v413
      %v420 = vmul.f32 %v408, %v414
      %v421 = vmul.f32 %v409, %v415
      %v422 = vmul.f32 %v410, %v416
      %v423 = vmul.f32 %v411, %v417
      %v424 = vmul.f32 %v412, %v418
      %v425 = vsub.f32 2.0, %v419
      %v426 = vsub.f32 2.0, %v420
      %v427 = vsub.f32 2.0, %v421
      %v428 = vsub.f32 2.0, %v422
      %v429 = vsub.f32 2.0, %v423
      %v430 = vsub.f32 2.0, %v424
      %v431 = vmul.f32 %v413, %v425
      %v432 = vmul.f32 %v414, %v426
      %v433 = vmul.f32 %v415, %v427
      %v434 = vmul.f32 %v416, %v428
      %v435 = vmul.f32 %v417, %v429
      %v436 = vmul.f32 %v418, %v430
      %v437 = vsub.f32 %v401, %v334
      %v438 = vsub.f32 %v402, %v335
      %v439 = vsub.f32 %v403, %v336
      %v440 = vsub.f32 %v404, %v337
      %v441 = vsub.f32 %v405, %v338
      %v442 = vsub.f32 %v406, %v339
      %v443 = vmul.f32 %v437, %v437
      %v444 = vmul.f32 %v438, %v438
      %v445 = vmul.f32 %v439, %v439
      %v446 = vmul.f32 %v440, %v440
      %v447 = vmul.f32 %v441, %v441
      %v448 = vmul.f32 %v442, %v442
      %v449 = vmul.f32 %v431, %v443
      %v450 = vmul.f32 %v432, %v444
      %v451 = vmul.f32 %v433, %v445
      %v452 = vmul.f32 %v434, %v446
      %v453 = vmul.f32 %v435, %v447
      %v454 = vmul.f32 %v436, %v448
      %v455 = vlog2.pop %v407
      %v456 = vmul.f32 %v455, 0.6931472
      %v457 = vlog2.pop %v408
      %v458 = vmul.f32 %v457, 0.6931472
      %v459 = vlog2.pop %v409
      %v460 = vmul.f32 %v459, 0.6931472
      %v461 = vlog2.pop %v410
      %v462 = vmul.f32 %v461, 0.6931472
      %v463 = vlog2.pop %v411
      %v464 = vmul.f32 %v463, 0.6931472
      %v465 = vlog2.pop %v412
      %v466 = vmul.f32 %v465, 0.6931472
      %v467 = vadd.f32 %v449, %v456
      %v468 = vadd.f32 %v450, %v458
      %v469 = vadd.f32 %v451, %v460
      %v470 = vadd.f32 %v452, %v462
      %v471 = vadd.f32 %v453, %v464
      %v472 = vadd.f32 %v454, %v466
      %v473 = vadd.f32 %v467, %v469
      %v474 = vsel %vm306, %v471, 0.0
      %v475 = vadd.f32 %v473, %v474
      %v476 = vrot.slane %v475, 4
      %v477 = vadd.f32 %v475, %v476
      %v478 = vrot.slane %v477, 2
      %v479 = vadd.f32 %v477, %v478
      %v480 = vrot.slane %v479, 1
      %v481 = vadd.f32 %v479, %v480
      %v482 = vadd.f32 %v468, %v470
      %v483 = vsel %vm306, %v472, 0.0
      %v484 = vadd.f32 %v482, %v483
      %v485 = vrot.slane %v484, 4
      %v486 = vadd.f32 %v484, %v485
      %v487 = vrot.slane %v486, 2
      %v488 = vadd.f32 %v486, %v487
      %v489 = vrot.slane %v488, 1
      %v490 = vadd.f32 %v488, %v489
      %v491 = vadd.f32 %v481, %v490
      %492 = vadd.xlane.f32.xlu0 %v491
      %v493 = vpop.xlane.xlu0 %492
      %vm494 = vcmask 0
      %495 = vst.msk [vmem:[%s267] sm:$0x1] %vm494, %v493
      %s496 = sadd.s32 %s18, %s19
      %p497 = scmp.lt.s32.totalorder %s496, 1
      %s498 = scalar_select %p497, %s496, 1
      %s499 = scalar_lea.vmem %s3, %s498
      // Predicated region
      $region33: #{tpu_custom_call.1} parent=31 // pred_check
        %p500 = pneg %p130
      $region34: #{tpu_custom_call.1} parent=31 // pred_check_branch
        %502 = sbr.rel (%p500) target = $region36
      $region35: #{tpu_custom_call.1} parent=31 // pred_region
        %s503 = sadd.s32 %s18, %s19
      $region36: #{tpu_custom_call.1} parent=31 // pred_fallthru
        _
    $region32: #{tpu_custom_call.1} parent=5 // pred_fallthru
      _
    %p504 = scmp.le.s32.totalorder 2, %s9
    // Predicated region
    $region37: #{tpu_custom_call.1} parent=5 // pred_check
      %p505 = pneg %p504
    $region38: #{tpu_custom_call.1} parent=5 // pred_check_branch
      %507 = sbr.rel (%p505) target = $region40
    $region39: #{tpu_custom_call.1} parent=5 // pred_region
      %s508 = ssub.s32 %s9, 2
      // Predicated region
      $region41: #{tpu_custom_call.1} parent=39 // pred_check
        %p509 = pneg %p136
      $region42: #{tpu_custom_call.1} parent=39 // pred_check_branch
        %511 = sbr.rel (%p509) target = $region44
      $region43: #{tpu_custom_call.1} parent=39 // pred_region
        %s512 = sadd.s32 %s20, %s21
        %p513 = scmp.lt.s32.totalorder %s512, 1
        %s514 = scalar_select %p513, %s512, 1
        %s515 = scalar_lea.vmem %s3, %s514
      $region44: #{tpu_custom_call.1} parent=39 // pred_fallthru
        _
    $region40: #{tpu_custom_call.1} parent=5 // pred_fallthru
      _
  $region6: #{tpu_custom_call.1} parent=0 // loop_footer
    %s13 = sadd.s32 1, %s9
  $region7: #{tpu_custom_call.1} parent=0 // loop_footer_branch
    %8 = sbr.rel target = $region3
  $region8: #{tpu_custom_call.1} parent=0 // loop_exit
    _

</llo_original>
